<compile_context>
chip_gen: v5e
topology: v5e:2x2
jax: 0.10.0
libtpu: 0.0.40
codegen_flags: <defaults>
</compile_context>

<pallas_src>
import functools

import jax
import jax.numpy as jnp
from jax.experimental import pallas as pl
from jax.experimental.pallas import tpu as pltpu


def _round_up(v, m):
    return ((v + m - 1) // m) * m


def ggb_kernel(norm_ref, x_ref, alpha_ref, alpha_t_ref, bias_ref, w_ref,
               o_ref, basis_ref, *, order, feat, out_real, var_denom,
               n_pad_cols):
    # ---- affine input normalization (scale/shift from global min/max, in SMEM) ----
    scale = norm_ref[0, 0]
    shift = norm_ref[0, 1]
    xn = x_ref[...] * scale + shift                      # (TB, F)

    alpha = alpha_ref[...]                               # (F, F)  SiLU(alpha)
    alpha_t = alpha_t_ref[...]                           # (F, F)  SiLU(alpha).T
    bias = bias_ref[...]                                 # (1, F), broadcasts over rows

    # xa = xn @ SiLU(alpha).T  — standard (M,K)@(K,N) MXU path, no in-kernel transpose
    xa = jnp.dot(xn, alpha_t, preferred_element_type=jnp.float32)

    # ---- Gegenbauer recurrence; stream each P_k into the VMEM basis scratch ----
    P_prev = jnp.ones_like(xn)                           # P0
    P_cur = 2.0 * (xa + bias)                            # P1
    basis_ref[:, 0:feat] = P_prev
    basis_ref[:, feat:2 * feat] = P_cur
    for n in range(1, order):
        first = 2.0 * (n * xn + xa) * P_cur
        # (n-1)*I + 2*alpha applied algebraically: no eye matrix, one matmul
        second = 2.0 * jnp.dot(P_prev, alpha, preferred_element_type=jnp.float32)
        if n > 1:
            second = second + (n - 1) * P_prev
        P_next = (first - second) * (1.0 / (n + 1))
        basis_ref[:, (n + 1) * feat:(n + 2) * feat] = P_next
        P_prev, P_cur = P_cur, P_next

    # ---- fused projection: one (TB, K*F) @ (K*F, O_pad) matmul ----
    acc = jnp.dot(basis_ref[...], w_ref[...], preferred_element_type=jnp.float32)

    # ---- per-row z-score over the REAL output columns ----
    # Padded weight columns are exact zeros => acc is exactly 0 there, and
    # (acc - mean) is exactly -mean there; subtract that contribution exactly.
    s1 = jnp.sum(acc, axis=-1, keepdims=True)
    mean = s1 * (1.0 / out_real)
    centered = acc - mean
    ss_all = jnp.sum(centered * centered, axis=-1, keepdims=True)
    ss = ss_all - n_pad_cols * (mean * mean)
    var = ss * (1.0 / var_denom)
    std = jnp.sqrt(var)
    inv_std = 1.0 / (std + 1e-8)                         # exact (correctness review)
    normed = centered * inv_std

    # SiLU; dropout is identity at inference
    o_ref[...] = (normed * jax.nn.sigmoid(normed)).astype(o_ref.dtype)


@functools.partial(jax.jit, static_argnames=("polynomial_order", "batch_tile"))
def ggb_forward(x, poly_weight, alpha_weight, bias, *, polynomial_order=3,
                batch_tile=1024):
    """x: (B, in_features) f32. poly_weight: (out, in*(order+1)).
    alpha_weight: (in, in). bias: (in,). Returns (B, out) f32."""
    B, F = x.shape
    K = polynomial_order + 1
    O = poly_weight.shape[0]
    assert poly_weight.shape == (O, F * K)
    assert polynomial_order >= 1

    # ---- static weight preprocessing (fused into this jit; precompute at load in prod) ----
    act_alpha = (alpha_weight * jax.nn.sigmoid(alpha_weight)).astype(jnp.float32)
    act_alpha_t = jnp.transpose(act_alpha)
    # torch flat basis index = f*K + k ; kernel basis column = k*F + f
    w2d = jnp.transpose(poly_weight.reshape(O, F, K), (2, 1, 0)).reshape(K * F, O)
    O_pad = _round_up(O, 128)                            # lane-dense output stores
    if O_pad != O:
        w2d = jnp.pad(w2d, ((0, 0), (0, O_pad - O)))
    w2d = w2d.astype(jnp.float32)
    bias2d = bias.reshape(1, F).astype(jnp.float32)

    # ---- global min/max folded into an affine (scale, shift) pair, passed via SMEM ----
    x = x.astype(jnp.float32)
    x_min = jnp.min(x)
    x_max = jnp.max(x)
    scale = 2.0 / (x_max - x_min + 1e-8)
    shift = -x_min * scale - 1.0
    norm_params = jnp.stack([scale, shift]).reshape(1, 2).astype(jnp.float32)

    # ---- batch tile selection ----
    TB = _round_up(min(batch_tile, B), 8)
    # Ensure >= 2 grid steps when the whole batch fits one tile (v7x dual-TC);
    # costs one extra ~0.35us step on single-TC chips (negligible).
    if B <= TB and TB >= 16:
        TB = _round_up((TB + 1) // 2, 8)

    BYTES = 4
    resident_bytes = (2 * F * F + F + K * F * O_pad) * BYTES

    def _step_bytes(tb):
        # double-buffered x tile + double-buffered out tile + basis scratch
        return (2 * tb * F + 2 * tb * O_pad + tb * K * F) * BYTES

    # Keep the per-step streaming + resident weights under ~24 MiB (v7x-safe).
    while _step_bytes(TB) + resident_bytes > 24 * 1024 * 1024 and TB > 8:
        TB = max(8, _round_up(TB // 2, 8))

    B_pad = _round_up(B, TB)
    x_p = x if B_pad == B else jnp.pad(x, ((0, B_pad - B), (0, 0)))
    nb = B_pad // TB

    vmem_limit = int(min(max(2 * (_step_bytes(TB) + resident_bytes) + (6 << 20),
                             16 << 20), 40 << 20))

    flops_per_row = (2 * F * F                                  # xn @ alpha.T
                     + (polynomial_order - 1) * (2 * F * F + 8 * F)  # recurrence
                     + 2 * K * F * O_pad                        # fused projection
                     + 8 * O_pad)                               # epilogue
    cost = pl.CostEstimate(
        flops=int(B_pad * flops_per_row),
        transcendentals=int(B_pad * O_pad),                     # sigmoid in SiLU
        bytes_accessed=int((B_pad * F + B_pad * O_pad + K * F * O_pad
                            + 2 * F * F + F + 2) * BYTES),
    )

    kernel = functools.partial(
        ggb_kernel, order=polynomial_order, feat=F, out_real=O,
        var_denom=max(O - 1, 1), n_pad_cols=O_pad - O)

    out_padded = pl.pallas_call(
        kernel,
        out_shape=jax.ShapeDtypeStruct((B_pad, O_pad), jnp.float32),
        grid=(nb,),
        in_specs=[
            pl.BlockSpec(memory_space=pltpu.MemorySpace.SMEM),   # (scale, shift) (1, 2)
            pl.BlockSpec((TB, F), lambda i: (i, 0)),             # x tile
            pl.BlockSpec((F, F), lambda i: (0, 0)),              # SiLU(alpha),   resident
            pl.BlockSpec((F, F), lambda i: (0, 0)),              # SiLU(alpha).T, resident
            pl.BlockSpec((1, F), lambda i: (0, 0)),              # bias,          resident
            pl.BlockSpec((K * F, O_pad), lambda i: (0, 0)),      # fused weight,  resident
        ],
        out_specs=pl.BlockSpec((TB, O_pad), lambda i: (i, 0)),
        scratch_shapes=[pltpu.VMEM((TB, K * F), jnp.float32)],   # basis buffer
        compiler_params=pltpu.CompilerParams(
            dimension_semantics=("parallel",),
            vmem_limit_bytes=vmem_limit,
        ),
        cost_estimate=cost,
    )(norm_params, x_p, act_alpha, act_alpha_t, bias2d, w2d)

    return out_padded[:B, :O]


def _ggb_reference(x, poly_weight, alpha_weight, bias, polynomial_order):
    """Pure-JAX reference mirroring the PyTorch forward (same z-score assumption)."""
    x = x.astype(jnp.float32)
    x_min, x_max = jnp.min(x), jnp.max(x)
    xn = 2.0 * (x - x_min) / (x_max - x_min + 1e-8) - 1.0
    a = alpha_weight * jax.nn.sigmoid(alpha_weight)
    P0 = jnp.ones_like(xn)
    P1 = 2.0 * (xn @ a.T + bias)
    polys = [P0, P1]
    for n in range(1, polynomial_order):
        first = 2.0 * (n * xn + xn @ a.T) * polys[-1]
        second = polys[-2] @ ((n - 1) * jnp.eye(xn.shape[1], dtype=jnp.float32) + 2.0 * a)
        polys.append((first - second) / (n + 1))
    basis = jnp.stack(polys, axis=-1).reshape(x.shape[0], -1)   # flat index = f*K + k
    out = basis @ poly_weight.T
    mean = jnp.mean(out, axis=-1, keepdims=True)
    std = jnp.std(out, axis=-1, keepdims=True, ddof=1)
    normed = (out - mean) / (std + 1e-8)
    return normed * jax.nn.sigmoid(normed)


if __name__ == "__main__":
    key = jax.random.PRNGKey(0)
    k_x, k_pw, k_aw, k_b = jax.random.split(key, 4)

    batch = 8
    in_features = 16
    out_features = 32
    polynomial_order = 3
    K = polynomial_order + 1

    # Deterministic synthetic parameters (shapes from GGB.__init__).
    x = jax.random.normal(k_x, (batch, in_features), dtype=jnp.float32)
    poly_weight = jax.random.normal(
        k_pw, (out_features, in_features * K), dtype=jnp.float32) * 0.1
    alpha_weight = jax.random.normal(
        k_aw, (in_features, in_features), dtype=jnp.float32) * 0.1
    bias = jax.random.normal(k_b, (in_features,), dtype=jnp.float32) * 0.1

    out = ggb_forward(x, poly_weight, alpha_weight, bias,
                      polynomial_order=polynomial_order)
    jax.block_until_ready(out)
    assert out.shape == (batch, out_features)
    assert jnp.all(jnp.isfinite(out))

    ref = _ggb_reference(x, poly_weight, alpha_weight, bias, polynomial_order)
    max_err = float(jnp.max(jnp.abs(out - ref)))
    assert jnp.allclose(out, ref, rtol=2e-3, atol=2e-3), f"max abs err {max_err}"

    print("KERNEL_OK")
</pallas_src>

<mosaic_0001>
module attributes {stable_mosaic.version = 11 : i64} {
  func.func @ggb_kernel(%arg0: i32, %arg1: memref<1x2xf32, #tpu.memory_space<smem>>, %arg2: memref<8x16xf32, #tpu.memory_space<vmem>>, %arg3: memref<16x16xf32, #tpu.memory_space<vmem>>, %arg4: memref<16x16xf32, #tpu.memory_space<vmem>>, %arg5: memref<1x16xf32, #tpu.memory_space<vmem>>, %arg6: memref<64x128xf32, #tpu.memory_space<vmem>>, %arg7: memref<8x128xf32, #tpu.memory_space<vmem>>, %arg8: memref<8x64xf32, #tpu.memory_space<vmem>>) attributes {dimension_semantics = [#tpu.dimension_semantics<parallel>], iteration_bounds = array<i64: 1>, scalar_prefetch = 0 : i64, scratch_operands = 1 : i64, tpu.core_type = #tpu.core_type<tc>, window_params = [{transform_indices = @transform_0, window_bounds = array<i64: 1, 2>}, {transform_indices = @transform_1, window_bounds = array<i64: 8, 16>}, {pipeline_mode = #tpu.pipeline_mode<synchronous>, transform_indices = @transform_2, window_bounds = array<i64: 16, 16>}, {pipeline_mode = #tpu.pipeline_mode<synchronous>, transform_indices = @transform_3, window_bounds = array<i64: 16, 16>}, {pipeline_mode = #tpu.pipeline_mode<synchronous>, transform_indices = @transform_4, window_bounds = array<i64: 1, 16>}, {pipeline_mode = #tpu.pipeline_mode<synchronous>, transform_indices = @transform_5, window_bounds = array<i64: 64, 128>}, {transform_indices = @transform_6, window_bounds = array<i64: 8, 128>}]} {
    %c0 = arith.constant 0 : index
    %c0_0 = arith.constant 0 : index
    %0 = memref.load %arg1[%c0, %c0_0] : memref<1x2xf32, #tpu.memory_space<smem>>
    %c0_1 = arith.constant 0 : index
    %c1 = arith.constant 1 : index
    %1 = memref.load %arg1[%c0_1, %c1] : memref<1x2xf32, #tpu.memory_space<smem>>
    %c0_2 = arith.constant 0 : index
    %c0_3 = arith.constant 0 : index
    %2 = vector.load %arg2[%c0_2, %c0_3] : memref<8x16xf32, #tpu.memory_space<vmem>>, vector<8x16xf32>
    %3 = vector.broadcast %0 : f32 to vector<8x16xf32>
    %4 = arith.mulf %2, %3 : vector<8x16xf32>
    %5 = vector.broadcast %1 : f32 to vector<8x16xf32>
    %6 = arith.addf %4, %5 : vector<8x16xf32>
    %c0_4 = arith.constant 0 : index
    %c0_5 = arith.constant 0 : index
    %7 = vector.load %arg3[%c0_4, %c0_5] : memref<16x16xf32, #tpu.memory_space<vmem>>, vector<16x16xf32>
    %c0_6 = arith.constant 0 : index
    %c0_7 = arith.constant 0 : index
    %8 = vector.load %arg4[%c0_6, %c0_7] : memref<16x16xf32, #tpu.memory_space<vmem>>, vector<16x16xf32>
    %c0_8 = arith.constant 0 : index
    %c0_9 = arith.constant 0 : index
    %9 = vector.load %arg5[%c0_8, %c0_9] : memref<1x16xf32, #tpu.memory_space<vmem>>, vector<1x16xf32>
    %cst = arith.constant dense<0.000000e+00> : vector<8x16xf32>
    %10 = tpu.matmul %6, %8, %cst {dimension_numbers = #tpu.dot_dimension_numbers<[1], [0], [0], [1], [0, 0, 1, 1], [], []>} : vector<8x16xf32>, vector<16x16xf32>, vector<8x16xf32> -> vector<8x16xf32>
    %cst_10 = arith.constant 1.000000e+00 : f32
    %11 = vector.broadcast %cst_10 : f32 to vector<8x16xf32>
    %12 = vector.broadcast %9 : vector<1x16xf32> to vector<8x16xf32>
    %13 = arith.addf %10, %12 : vector<8x16xf32>
    %cst_11 = arith.constant 2.000000e+00 : f32
    %14 = vector.broadcast %cst_11 : f32 to vector<8x16xf32>
    %15 = arith.mulf %14, %13 : vector<8x16xf32>
    %c0_12 = arith.constant 0 : index
    %c0_13 = arith.constant 0 : index
    %16 = vector.load %arg8[%c0_12, %c0_13] : memref<8x64xf32, #tpu.memory_space<vmem>>, vector<8x16xf32>
    tpu.vector_store %arg8[%c0_12, %c0_13], %11 {strides = array<i32>} : memref<8x64xf32, #tpu.memory_space<vmem>>, vector<8x16xf32>,
    %c0_14 = arith.constant 0 : index
    %c16 = arith.constant 16 : index
    %17 = vector.load %arg8[%c0_14, %c16] : memref<8x64xf32, #tpu.memory_space<vmem>>, vector<8x16xf32>
    tpu.vector_store %arg8[%c0_14, %c16], %15 {strides = array<i32>} : memref<8x64xf32, #tpu.memory_space<vmem>>, vector<8x16xf32>,
    %cst_15 = arith.constant 1.000000e+00 : f32
    %18 = vector.broadcast %cst_15 : f32 to vector<8x16xf32>
    %19 = arith.mulf %18, %6 : vector<8x16xf32>
    %20 = arith.addf %19, %10 : vector<8x16xf32>
    %cst_16 = arith.constant 2.000000e+00 : f32
    %21 = vector.broadcast %cst_16 : f32 to vector<8x16xf32>
    %22 = arith.mulf %21, %20 : vector<8x16xf32>
    %23 = arith.mulf %22, %15 : vector<8x16xf32>
    %cst_17 = arith.constant dense<0.000000e+00> : vector<8x16xf32>
    %24 = tpu.matmul %11, %7, %cst_17 {dimension_numbers = #tpu.dot_dimension_numbers<[1], [0], [0], [1], [0, 0, 1, 1], [], []>} : vector<8x16xf32>, vector<16x16xf32>, vector<8x16xf32> -> vector<8x16xf32>
    %cst_18 = arith.constant 2.000000e+00 : f32
    %25 = vector.broadcast %cst_18 : f32 to vector<8x16xf32>
    %26 = arith.mulf %25, %24 : vector<8x16xf32>
    %27 = arith.subf %23, %26 : vector<8x16xf32>
    %cst_19 = arith.constant 5.000000e-01 : f32
    %28 = vector.broadcast %cst_19 : f32 to vector<8x16xf32>
    %29 = arith.mulf %27, %28 : vector<8x16xf32>
    %c0_20 = arith.constant 0 : index
    %c32 = arith.constant 32 : index
    %30 = vector.load %arg8[%c0_20, %c32] : memref<8x64xf32, #tpu.memory_space<vmem>>, vector<8x16xf32>
    tpu.vector_store %arg8[%c0_20, %c32], %29 {strides = array<i32>} : memref<8x64xf32, #tpu.memory_space<vmem>>, vector<8x16xf32>,
    %cst_21 = arith.constant 2.000000e+00 : f32
    %31 = vector.broadcast %cst_21 : f32 to vector<8x16xf32>
    %32 = arith.mulf %31, %6 : vector<8x16xf32>
    %33 = arith.addf %32, %10 : vector<8x16xf32>
    %cst_22 = arith.constant 2.000000e+00 : f32
    %34 = vector.broadcast %cst_22 : f32 to vector<8x16xf32>
    %35 = arith.mulf %34, %33 : vector<8x16xf32>
    %36 = arith.mulf %35, %29 : vector<8x16xf32>
    %cst_23 = arith.constant dense<0.000000e+00> : vector<8x16xf32>
    %37 = tpu.matmul %15, %7, %cst_23 {dimension_numbers = #tpu.dot_dimension_numbers<[1], [0], [0], [1], [0, 0, 1, 1], [], []>} : vector<8x16xf32>, vector<16x16xf32>, vector<8x16xf32> -> vector<8x16xf32>
    %cst_24 = arith.constant 2.000000e+00 : f32
    %38 = vector.broadcast %cst_24 : f32 to vector<8x16xf32>
    %39 = arith.mulf %38, %37 : vector<8x16xf32>
    %cst_25 = arith.constant 1.000000e+00 : f32
    %40 = vector.broadcast %cst_25 : f32 to vector<8x16xf32>
    %41 = arith.mulf %40, %15 : vector<8x16xf32>
    %42 = arith.addf %39, %41 : vector<8x16xf32>
    %43 = arith.subf %36, %42 : vector<8x16xf32>
    %cst_26 = arith.constant 0.333333343 : f32
    %44 = vector.broadcast %cst_26 : f32 to vector<8x16xf32>
    %45 = arith.mulf %43, %44 : vector<8x16xf32>
    %c0_27 = arith.constant 0 : index
    %c48 = arith.constant 48 : index
    %46 = vector.load %arg8[%c0_27, %c48] : memref<8x64xf32, #tpu.memory_space<vmem>>, vector<8x16xf32>
    tpu.vector_store %arg8[%c0_27, %c48], %45 {strides = array<i32>} : memref<8x64xf32, #tpu.memory_space<vmem>>, vector<8x16xf32>,
    %c0_28 = arith.constant 0 : index
    %c0_29 = arith.constant 0 : index
    %47 = vector.load %arg8[%c0_28, %c0_29] : memref<8x64xf32, #tpu.memory_space<vmem>>, vector<8x64xf32>
    %c0_30 = arith.constant 0 : index
    %c0_31 = arith.constant 0 : index
    %48 = vector.load %arg6[%c0_30, %c0_31] : memref<64x128xf32, #tpu.memory_space<vmem>>, vector<64x128xf32>
    %cst_32 = arith.constant dense<0.000000e+00> : vector<8x128xf32>
    %49 = tpu.matmul %47, %48, %cst_32 {dimension_numbers = #tpu.dot_dimension_numbers<[1], [0], [0], [1], [0, 0, 1, 1], [], []>} : vector<8x64xf32>, vector<64x128xf32>, vector<8x128xf32> -> vector<8x128xf32>
    %cst_33 = arith.constant dense<0.000000e+00> : vector<8xf32>
    %50 = vector.multi_reduction <add>, %49, %cst_33 [1] : vector<8x128xf32> to vector<8xf32>
    %51 = vector.shape_cast %50 : vector<8xf32> to vector<8x1xf32>
    %cst_34 = arith.constant 3.125000e-02 : f32
    %52 = vector.broadcast %cst_34 : f32 to vector<8x1xf32>
    %53 = arith.mulf %51, %52 : vector<8x1xf32>
    %54 = vector.broadcast %53 : vector<8x1xf32> to vector<8x128xf32>
    %55 = arith.subf %49, %54 : vector<8x128xf32>
    %56 = arith.mulf %55, %55 : vector<8x128xf32>
    %cst_35 = arith.constant dense<0.000000e+00> : vector<8xf32>
    %57 = vector.multi_reduction <add>, %56, %cst_35 [1] : vector<8x128xf32> to vector<8xf32>
    %58 = vector.shape_cast %57 : vector<8xf32> to vector<8x1xf32>
    %59 = arith.mulf %53, %53 : vector<8x1xf32>
    %cst_36 = arith.constant 9.600000e+01 : f32
    %60 = vector.broadcast %cst_36 : f32 to vector<8x1xf32>
    %61 = arith.mulf %60, %59 : vector<8x1xf32>
    %62 = arith.subf %58, %61 : vector<8x1xf32>
    %cst_37 = arith.constant 0.0322580636 : f32
    %63 = vector.broadcast %cst_37 : f32 to vector<8x1xf32>
    %64 = arith.mulf %62, %63 : vector<8x1xf32>
    %65 = math.sqrt %64 : vector<8x1xf32>
    %cst_38 = arith.constant 9.99999993E-9 : f32
    %66 = vector.broadcast %cst_38 : f32 to vector<8x1xf32>
    %67 = arith.addf %65, %66 : vector<8x1xf32>
    %cst_39 = arith.constant 1.000000e+00 : f32
    %68 = vector.broadcast %cst_39 : f32 to vector<8x1xf32>
    %69 = arith.divf %68, %67 : vector<8x1xf32>
    %70 = vector.broadcast %69 : vector<8x1xf32> to vector<8x128xf32>
    %71 = arith.mulf %55, %70 : vector<8x128xf32>
    %72 = arith.negf %71 : vector<8x128xf32>
    %73 = math.exp %72 : vector<8x128xf32>
    %cst_40 = arith.constant 1.000000e+00 : f32
    %74 = vector.broadcast %cst_40 : f32 to vector<8x128xf32>
    %75 = arith.addf %74, %73 : vector<8x128xf32>
    %76 = arith.divf %74, %75 : vector<8x128xf32>
    %77 = arith.mulf %71, %76 : vector<8x128xf32>
    %c0_41 = arith.constant 0 : index
    %c0_42 = arith.constant 0 : index
    %78 = vector.load %arg7[%c0_41, %c0_42] : memref<8x128xf32, #tpu.memory_space<vmem>>, vector<8x128xf32>
    tpu.vector_store %arg7[%c0_41, %c0_42], %77 {strides = array<i32>} : memref<8x128xf32, #tpu.memory_space<vmem>>, vector<8x128xf32>,
    return
  }
  func.func @transform_0(%arg0: i32) -> (i32, i32) {
    %c0_i32 = arith.constant 0 : i32
    %c0_i32_0 = arith.constant 0 : i32
    %c0_i32_1 = arith.constant 0 : i32
    return %c0_i32, %c0_i32_0 : i32, i32
  }
  func.func @transform_1(%arg0: i32) -> (i32, i32) {
    %c0_i32 = arith.constant 0 : i32
    %c0_i32_0 = arith.constant 0 : i32
    return %arg0, %c0_i32 : i32, i32
  }
  func.func @transform_2(%arg0: i32) -> (i32, i32) {
    %c0_i32 = arith.constant 0 : i32
    %c0_i32_0 = arith.constant 0 : i32
    %c0_i32_1 = arith.constant 0 : i32
    return %c0_i32, %c0_i32_0 : i32, i32
  }
  func.func @transform_3(%arg0: i32) -> (i32, i32) {
    %c0_i32 = arith.constant 0 : i32
    %c0_i32_0 = arith.constant 0 : i32
    %c0_i32_1 = arith.constant 0 : i32
    return %c0_i32, %c0_i32_0 : i32, i32
  }
  func.func @transform_4(%arg0: i32) -> (i32, i32) {
    %c0_i32 = arith.constant 0 : i32
    %c0_i32_0 = arith.constant 0 : i32
    %c0_i32_1 = arith.constant 0 : i32
    return %c0_i32, %c0_i32_0 : i32, i32
  }
  func.func @transform_5(%arg0: i32) -> (i32, i32) {
    %c0_i32 = arith.constant 0 : i32
    %c0_i32_0 = arith.constant 0 : i32
    %c0_i32_1 = arith.constant 0 : i32
    return %c0_i32, %c0_i32_0 : i32, i32
  }
  func.func @transform_6(%arg0: i32) -> (i32, i32) {
    %c0_i32 = arith.constant 0 : i32
    %c0_i32_0 = arith.constant 0 : i32
    return %arg0, %c0_i32 : i32, i32
  }
}

</mosaic_0001>

<llo_original>
// kernel: ggb_forward.1
$region0: #{ggb_forward.1}
  #allocation0 [shape = 'u32[]', space=smem, size = 0x4, offset = 0x4, fixed_abs, tag = 'smem constant byte address 0x4 - core index']
  #allocation1 [shape = 'u32[72,128]{1,0:T(1,128)}', space=vmem, size = 0x9000, scoped, tag = 'internal scratch']
  #allocation2 [shape = 'f32[8,64]{1,0:T(8,128)}', space=vmem, size = 0x1000, scoped, tag = 'scratch operand']
  %s0 = inlined_call_operand.vmem [shape: f32[1,2], index: 0, kind: input, shape index: {}]
  %s1 = inlined_call_operand.vmem [shape: f32[8,16], index: 1, kind: input, shape index: {}]
  %s2 = inlined_call_operand.vmem [shape: f32[16,16], index: 2, kind: input, shape index: {}]
  %s3 = inlined_call_operand.vmem [shape: f32[16,16], index: 3, kind: input, shape index: {}]
  %s4 = inlined_call_operand.vmem [shape: f32[1,16], index: 4, kind: input, shape index: {}]
  %s5 = inlined_call_operand.vmem [shape: f32[64,128], index: 5, kind: input, shape index: {}]
  %s6 = inlined_call_operand.hbm [shape: f32[8,128], index: 6, kind: output, shape index: {}]
  %s7 = sld [smem:[#allocation0]]
  $region38: #{ggb_forward.1} parent=0
    _
  %s9 = ssub.s32 1, %s7
  %s10 = scalar_select 0, %s9, %s7
  $region1: #{ggb_forward.1} parent=0
    #allocation3 [shape = 'u8[512]{0}', space=smem, size = 0x200, scoped, tag = 'input window, operand 0, single buffered']
    #allocation4 [shape = 's32[1]{0}', space=sflag, size = 0x4, scoped, tag = 'scoped memory for ggb_forward.1']
    #allocation5 [shape = 's32[1]{0}', space=sflag, size = 0x4, scoped, tag = 'scoped memory for ggb_forward.1']
    #allocation6 [shape = 'u8[4096]{0}', space=vmem, size = 0x1000, scoped, tag = 'output window, operand 0, single buffered']
    %11 = vsyncpa [#allocation5], 0
    %12 = vsyncpa [#allocation4], 0
    // Predicated region
    $region2: #{ggb_forward.1} parent=1 // pred_check
      _
    $region3: #{ggb_forward.1} parent=1 // pred_check_branch
      %14 = sbr.rel (0) target = $region5
    $region4: #{ggb_forward.1} parent=1 // pred_region
      %16 = vsyncadd [#allocation5], 0
      %s18 = sshll.u32 %s0, 4
      %s19 = int_to_ptr.vmem [resolvable:$true] %s18
      %21 = dma.vmem_to_smem %s19, 16, [#allocation3], [#allocation5]
    $region5: #{ggb_forward.1} parent=1 // pred_fallthru
      _
    // Predicated region
    $region6: #{ggb_forward.1} parent=1 // pred_check
      _
    $region7: #{ggb_forward.1} parent=1 // pred_check_branch
      %23 = sbr.rel (0) target = $region9
    $region8: #{ggb_forward.1} parent=1 // pred_region
      _
    $region9: #{ggb_forward.1} parent=1 // pred_fallthru
      _
    // Predicated region
    $region10: #{ggb_forward.1} parent=1 // pred_check
      _
    $region11: #{ggb_forward.1} parent=1 // pred_check_branch
      %25 = sbr.rel (0) target = $region13
    $region12: #{ggb_forward.1} parent=1 // pred_region
      _
    $region13: #{ggb_forward.1} parent=1 // pred_fallthru
      _
    // Predicated region
    $region14: #{ggb_forward.1} parent=1 // pred_check
      _
    $region15: #{ggb_forward.1} parent=1 // pred_check_branch
      %27 = sbr.rel (0) target = $region17
    $region16: #{ggb_forward.1} parent=1 // pred_region
      _
    $region17: #{ggb_forward.1} parent=1 // pred_fallthru
      _
    // Predicated region
    $region18: #{ggb_forward.1} parent=1 // pred_check
      _
    $region19: #{ggb_forward.1} parent=1 // pred_check_branch
      %29 = sbr.rel (0) target = $region21
    $region20: #{ggb_forward.1} parent=1 // pred_region
      _
    $region21: #{ggb_forward.1} parent=1 // pred_fallthru
      _
    // Predicated region
    $region22: #{ggb_forward.1} parent=1 // pred_check
      _
    $region23: #{ggb_forward.1} parent=1 // pred_check_branch
      %31 = sbr.rel (0) target = $region25
    $region24: #{ggb_forward.1} parent=1 // pred_region
      _
    $region25: #{ggb_forward.1} parent=1 // pred_fallthru
      _
    // Predicated region
    $region26: #{ggb_forward.1} parent=1 // pred_check
      _
    $region27: #{ggb_forward.1} parent=1 // pred_check_branch
      %33 = sbr.rel (0) target = $region29
    $region28: #{ggb_forward.1} parent=1 // pred_region
      %35 = dma.done [#allocation5], 16
    $region29: #{ggb_forward.1} parent=1 // pred_fallthru
      _
    %36 = sfence
    %s37 = sld [smem:[#allocation3]]
    %s38 = sld [smem:[#allocation3 + $0x1]]
    %v39 = vld [vmem:[%s1] sm:$0xff]
    %v40 = vstv %s37
    %v41 = vmul.f32 %v39, %v40
    %v42 = vstv %s38
    %v43 = vadd.f32 %v41, %v42
    %v44 = vld [vmem:[%s2] sm:$0xff]
    %v45 = vld [vmem:[%s2 + $0x8] sm:$0xff]
    %v46 = vld [vmem:[%s3] sm:$0xff]
    %v47 = vld [vmem:[%s3 + $0x8] sm:$0xff]
    %v48 = vld [vmem:[%s4] sm:$0x1]
    %vm49 = vcmask 130048
    %v51 = vsel %vm49, %v43, 0
    %53 = vmatpush.msra.mxu0 0.0
    %54 = vmatpush.msra.mxu0 0.0
    %55 = vmatpush.msra.mxu0 0.0
    %56 = vmatpush.msra.mxu0 0.0
    %57 = vmatpush.msra.mxu0 0.0
    %58 = vmatpush.msra.mxu0 0.0
    %59 = vmatpush.msra.mxu0 0.0
    %60 = vmatpush.msra.mxu0 0.0
    %61 = vmatpush.msra.mxu0 0.0
    %62 = vmatpush.msra.mxu0 0.0
    %63 = vmatpush.msra.mxu0 0.0
    %64 = vmatpush.msra.mxu0 0.0
    %65 = vmatpush.msra.mxu0 0.0
    %66 = vmatpush.msra.mxu0 0.0
    %67 = vmatpush.msra.mxu0 %v47
    %68 = vmatpush.msra.mxu0 %v46
    %69 = vmatmul.f32.gmra.mxu0 %v51
    %v70 = vpop.f32.mrf.mxu0
    %v71 = vadd.f32 0.0, %v70
    %72 = vdwg.mxu0
    %v74 = vperm.slane %v48, 0
    %v76 = vadd.f32 %v71, %v74
    %v77 = vmul.f32 %v76, 2.0
    %78 = vst.msk [vmem:[#allocation2] sm:$0xff] %vm49, 1.0
    %80 = vrot.lane.b32.xlu0 %v77, 16
    %v81 = vpop.permute.xlu0 %80
    %vm83 = vcmask 261248
    %84 = vst.msk [vmem:[#allocation2] sm:$0xff] %vm83, %v81
    %v85 = vadd.f32 %v43, %v71
    %v86 = vmul.f32 %v85, 2.0
    %v87 = vmul.f32 %v86, %v77
    %v89 = vsel %vm49, 1.0, 0
    %91 = vmatpush.msra.mxu0 0.0
    %92 = vmatpush.msra.mxu0 0.0
    %93 = vmatpush.msra.mxu0 0.0
    %94 = vmatpush.msra.mxu0 0.0
    %95 = vmatpush.msra.mxu0 0.0
    %96 = vmatpush.msra.mxu0 0.0
    %97 = vmatpush.msra.mxu0 0.0
    %98 = vmatpush.msra.mxu0 0.0
    %99 = vmatpush.msra.mxu0 0.0
    %100 = vmatpush.msra.mxu0 0.0
    %101 = vmatpush.msra.mxu0 0.0
    %102 = vmatpush.msra.mxu0 0.0
    %103 = vmatpush.msra.mxu0 0.0
    %104 = vmatpush.msra.mxu0 0.0
    %105 = vmatpush.msra.mxu0 %v45
    %106 = vmatpush.msra.mxu0 %v44
    %107 = vmatmul.f32.gmra.mxu0 %v89
    %v108 = vpop.f32.mrf.mxu0
    %v109 = vadd.f32 0.0, %v108
    %110 = vdwg.mxu0
    %v111 = vmul.f32 %v109, 2.0
    %v112 = vsub.f32 %v87, %v111
    %v113 = vmul.f32 %v112, 0.5
    %115 = vrot.lane.b32.xlu0 %v113, 32
    %v116 = vpop.permute.xlu0 %115
    %vm118 = vcmask 392448
    %119 = vst.msk [vmem:[#allocation2] sm:$0xff] %vm118, %v116
    %v120 = vmul.f32 %v43, 2.0
    %v121 = vadd.f32 %v120, %v71
    %v122 = vmul.f32 %v121, 2.0
    %v123 = vmul.f32 %v122, %v113
    %v124 = vsel %vm49, %v77, 0
    %126 = vmatpush.msra.mxu0 0.0
    %127 = vmatpush.msra.mxu0 0.0
    %128 = vmatpush.msra.mxu0 0.0
    %129 = vmatpush.msra.mxu0 0.0
    %130 = vmatpush.msra.mxu0 0.0
    %131 = vmatpush.msra.mxu0 0.0
    %132 = vmatpush.msra.mxu0 0.0
    %133 = vmatpush.msra.mxu0 0.0
    %134 = vmatpush.msra.mxu0 0.0
    %135 = vmatpush.msra.mxu0 0.0
    %136 = vmatpush.msra.mxu0 0.0
    %137 = vmatpush.msra.mxu0 0.0
    %138 = vmatpush.msra.mxu0 0.0
    %139 = vmatpush.msra.mxu0 0.0
    %140 = vmatpush.msra.mxu0 %v45
    %141 = vmatpush.msra.mxu0 %v44
    %142 = vmatmul.f32.gmra.mxu0 %v124
    %v143 = vpop.f32.mrf.mxu0
    %v144 = vadd.f32 0.0, %v143
    %145 = vdwg.mxu0
    %v146 = vmul.f32 %v144, 2.0
    %v147 = vadd.f32 %v146, %v77
    %v148 = vsub.f32 %v123, %v147
    %v149 = vmul.f32 %v148, 0.33333334
    %151 = vrot.lane.b32.xlu0 %v149, 48
    %v152 = vpop.permute.xlu0 %151
    %vm154 = vcmask 523648
    %155 = vst.msk [vmem:[#allocation2] sm:$0xff] %vm154, %v152
    %v156 = vld [vmem:[#allocation2] sm:$0xff]
    %v157 = vld [vmem:[%s5] sm:$0xff]
    %v158 = vld [vmem:[%s5 + $0x8] sm:$0xff]
    %v159 = vld [vmem:[%s5 + $0x10] sm:$0xff]
    %v160 = vld [vmem:[%s5 + $0x18] sm:$0xff]
    %v161 = vld [vmem:[%s5 + $0x20] sm:$0xff]
    %v162 = vld [vmem:[%s5 + $0x28] sm:$0xff]
    %v163 = vld [vmem:[%s5 + $0x30] sm:$0xff]
    %v164 = vld [vmem:[%s5 + $0x38] sm:$0xff]
    %vm165 = vcmask 523264
    %v167 = vsel %vm165, %v156, 0
    %169 = vmatpush.msra.mxu0 0.0
    %170 = vmatpush.msra.mxu0 0.0
    %171 = vmatpush.msra.mxu0 0.0
    %172 = vmatpush.msra.mxu0 0.0
    %173 = vmatpush.msra.mxu0 0.0
    %174 = vmatpush.msra.mxu0 0.0
    %175 = vmatpush.msra.mxu0 0.0
    %176 = vmatpush.msra.mxu0 0.0
    %177 = vmatpush.msra.mxu0 %v164
    %178 = vmatpush.msra.mxu0 %v163
    %179 = vmatpush.msra.mxu0 %v162
    %180 = vmatpush.msra.mxu0 %v161
    %181 = vmatpush.msra.mxu0 %v160
    %182 = vmatpush.msra.mxu0 %v159
    %183 = vmatpush.msra.mxu0 %v158
    %184 = vmatpush.msra.mxu0 %v157
    %185 = vmatmul.f32.gmra.mxu0 %v167
    %v186 = vpop.f32.mrf.mxu0
    %v187 = vadd.f32 0.0, %v186
    %188 = vdwg.mxu0
    %189 = vadd.xlane.f32.xlu0 %v187
    %v190 = vpop.xlane.xlu0 %189
    %v191 = vmul.f32 %v190, 0.03125
    %v192 = vsub.f32 %v187, %v191
    %v193 = vmul.f32 %v192, %v192
    %194 = vadd.xlane.f32.xlu0 %v193
    %v195 = vpop.xlane.xlu0 %194
    %v196 = vmul.f32 %v191, %v191
    %v197 = vmul.f32 %v196, 96.0
    %v198 = vsub.f32 %v195, %v197
    %v199 = vmul.f32 %v198, 0.032258064
    %v200 = vrsqrt.pop %v199
    %v201 = vmul.f32 %v200, %v199
    %v202 = vmul.f32 %v201, %v200
    %v203 = vmul.f32 0.5, %v202
    %v204 = vsub.f32 1.5, %v203
    %v205 = vmul.f32 %v200, %v204
    %v206 = vmul.f32 %v199, %v205
    %vm207 = vcmp.eq.f32.partialorder %v199, inf
    %v208 = vsel %vm207, %v199, %v206
    %vm209 = vcmp.eq.f32.partialorder %v199, 0.0
    %v210 = vand.u32 %v199, 2147483648
    %v211 = vsel %vm209, %v210, %v208
    %v212 = vadd.f32 %v211, 1e-08
    %v213 = vrcp.pop %v212
    %v214 = vmul.f32 %v212, %v213
    %v215 = vsub.f32 1.0, %v214
    %v216 = vmul.f32 %v213, %v215
    %v217 = vadd.f32 %v213, %v216
    %vm218 = vweird.f32 %v212
    %vm219 = vweird.f32 %v213
    %vm220 = vmor %vm218, %vm219
    %v221 = vsel %vm220, %v213, %v217
    %v222 = vand.u32 2147483647, %v212
    %vm223 = vcmp.eq.f32.partialorder %v222, 8.507059e+37
    %v224 = vand.u32 %v212, 2147483648
    %v225 = vor.u32 1.1754944e-38, %v224
    %v226 = vsel %vm223, %v225, %v221
    %v227 = vmul.f32 1.0, %v226
    %v228 = vmul.f32 %v192, %v227
    %v229 = vxor.u32 %v228, 2147483648
    %v230 = vmul.f32 %v229, 1.442695
    %v231 = vpow.pop %v230
    %v232 = vadd.f32 %v231, 1.0
    %v233 = vrcp.pop %v232
    %v234 = vmul.f32 %v232, %v233
    %v235 = vsub.f32 1.0, %v234
    %v236 = vmul.f32 %v233, %v235
    %v237 = vadd.f32 %v233, %v236
    %vm238 = vweird.f32 %v232
    %vm239 = vweird.f32 %v233
    %vm240 = vmor %vm238, %vm239
    %v241 = vsel %vm240, %v233, %v237
    %v242 = vand.u32 2147483647, %v232
    %vm243 = vcmp.eq.f32.partialorder %v242, 8.507059e+37
    %v244 = vand.u32 %v232, 2147483648
    %v245 = vor.u32 1.1754944e-38, %v244
    %v246 = vsel %vm243, %v245, %v241
    %v247 = vmul.f32 1.0, %v246
    %v248 = vmul.f32 %v228, %v247
    %249 = vst [vmem:[#allocation6] sm:$0xff] %v248
    // Predicated region
    $region30: #{ggb_forward.1} parent=1 // pred_check
      _
    $region31: #{ggb_forward.1} parent=1 // pred_check_branch
      %251 = sbr.rel (0) target = $region33
    $region32: #{ggb_forward.1} parent=1 // pred_region
      %253 = vsyncadd [#allocation4], 0
      %s255 = sshll.u32 [#allocation6], 4
      %s256 = int_to_ptr.vmem [resolvable:$true] %s255
      %s257 = sshll.u32 %s6, 4
      %s258 = int_to_ptr.hbm [resolvable:$true] %s257
      %260 = dma.vmem_to_hbm [thread:$0]  %s256, 128, %s258, [#allocation4]
    $region33: #{ggb_forward.1} parent=1 // pred_fallthru
      _
    // Predicated region
    $region34: #{ggb_forward.1} parent=1 // pred_check
      _
    $region35: #{ggb_forward.1} parent=1 // pred_check_branch
      %262 = sbr.rel (0) target = $region37
    $region36: #{ggb_forward.1} parent=1 // pred_region
      %264 = dma.done [#allocation4], 128
    $region37: #{ggb_forward.1} parent=1 // pred_fallthru
      _
    %265 = vsyncpa [#allocation4], 1
    %266 = vsyncpa [#allocation5], 1

</llo_original>
